<compile_context>
chip_gen: v6e
topology: v6e:2x2x1
jax: 0.10.0
libtpu: 0.0.40
codegen_flags: <defaults>
</compile_context>

<pallas_src>
import jax
import jax.numpy as jnp
from jax.experimental import pallas as pl
from jax.experimental.pallas import tpu as pltpu


def _round_up(n, m):
    return ((n + m - 1) // m) * m


def _linear_sigmoid_kernel(params_ref, x_ref, o_ref):
    # params_ref: SMEM (F+1,) f32 = [w0..w3, b]
    # x_ref:      VMEM (F, 8, TB) f32  (feature, sublane, lane) -- dense planes
    # o_ref:      VMEM (8, TB) f32     -- dense, lane-wide output tile
    F = x_ref.shape[0]
    # Unrolled VPU multiply-add over the 4 features on dense (8, TB) planes.
    z = x_ref[0] * params_ref[0]
    for f in range(1, F):
        z = z + x_ref[f] * params_ref[f]
    z = z + params_ref[F]  # bias
    # sigmoid(z) = 0.5 * tanh(0.5 * z) + 0.5  -> one EUP push per element.
    o_ref[...] = (0.5 * jnp.tanh(0.5 * z) + 0.5).astype(o_ref.dtype)


def _linear_sigmoid_pallas(x, params, *, tb):
    """Kernel path. x: (B, F) f32 with B % 8 == 0."""
    B, F = x.shape
    Bsub = B // 8

    # Feature-major + densified to 8 sublanes.  The reshape is free; the
    # transpose is the remaining wrapper-side HBM pass (see TODO above).
    xr = x.T.reshape(F, 8, Bsub)

    # Lane tile: multiple of 128, as big as possible (amortize ~0.35us/step
    # pipeline overhead) but leave >= 4 grid steps for v7x's two TensorCores.
    # Double-buffered VMEM footprint ~ 320*TB bytes (<= ~10 MiB at TB=32768),
    # comfortably inside the default scoped VMEM on v5e/v6e/v7x.
    TB = min(_round_up(tb, 128), _round_up(pl.cdiv(Bsub, 4), 128))
    TB = max(TB, 128)
    grid = (pl.cdiv(Bsub, TB),)  # boundary block masked; no padding needed

    out = pl.pallas_call(
        _linear_sigmoid_kernel,
        out_shape=jax.ShapeDtypeStruct((8, Bsub), x.dtype),
        grid_spec=pltpu.PrefetchScalarGridSpec(
            num_scalar_prefetch=1,  # params -> SMEM
            grid=grid,
            in_specs=[
                # Full feature (4) and sublane (8) dims, TB lanes per step.
                pl.BlockSpec((F, 8, TB), lambda j, params: (0, 0, j)),
            ],
            out_specs=pl.BlockSpec((8, TB), lambda j, params: (0, j)),
        ),
        compiler_params=pltpu.CompilerParams(
            # Independent batch tiles -> shard across TensorCores on v7x.
            dimension_semantics=("parallel",),
        ),
    )(params, xr)

    # Row-major flatten of (8, B//8) restores batch order -> free reshape.
    return out.reshape(B, 1)


def linear_sigmoid(x, weight, bias, *, tb=32768, min_kernel_batch=4096):
    """Forward pass of sigmoid(nn.Linear(4, 1)(x)).

    x:      (B, F) f32
    weight: (1, F) f32   (PyTorch nn.Linear layout)
    bias:   (1,)   f32
    returns (B, 1) f32
    """
    B, F = x.shape
    assert weight.shape == (1, F) and bias.shape == (1,)

    # Small-batch fallback: kernel launch / DMA / transpose overhead dominates.
    if B < min_kernel_batch:
        return jax.nn.sigmoid(x @ weight.T + bias)

    params = jnp.concatenate(
        [weight.reshape(-1), bias.reshape(-1)]).astype(jnp.float32)

    Bk = (B // 8) * 8  # densified layout needs a multiple of 8 rows
    y = _linear_sigmoid_pallas(x[:Bk], params, tb=tb)
    if Bk != B:
        # Tiny tail (< 8 rows) via plain XLA, then stitch.
        y_tail = jax.nn.sigmoid(x[Bk:] @ weight.T + bias)
        y = jnp.concatenate([y, y_tail], axis=0)
    return y


def reference(x, weight, bias):
    return jax.nn.sigmoid(x @ weight.T + bias)


if __name__ == "__main__":
    key = jax.random.PRNGKey(0)
    k_x, k_w, k_b = jax.random.split(key, 3)

    F = 4  # Titanic-style: 4 input features

    # Deterministic parameter init mimicking nn.Linear(4, 1) shapes.
    bound = 1.0 / jnp.sqrt(F)
    weight = jax.random.uniform(k_w, (1, F), minval=-bound, maxval=bound,
                                dtype=jnp.float32)
    bias = jax.random.uniform(k_b, (1,), minval=-bound, maxval=bound,
                              dtype=jnp.float32)

    # 1) Tiny batch (B=8): exercises the small-batch fallback path.
    B = 8
    x = jax.random.normal(k_x, (B, F), dtype=jnp.float32)
    y = linear_sigmoid(x, weight, bias)
    jax.block_until_ready(y)
    assert y.shape == (B, 1)
    assert jnp.allclose(y, reference(x, weight, bias), atol=1e-4, rtol=1e-4)

    # 2) Larger batch: exercises the Pallas kernel with a cdiv grid
    #    (masked boundary block, Bsub=1025 not a multiple of TB) and the
    #    <8-row tail stitch (8204 % 8 == 4).
    B2 = 8204
    x2 = jax.random.normal(jax.random.PRNGKey(1), (B2, F), dtype=jnp.float32)
    y2 = linear_sigmoid(x2, weight, bias)
    jax.block_until_ready(y2)
    assert y2.shape == (B2, 1)
    assert jnp.allclose(y2, reference(x2, weight, bias), atol=1e-4, rtol=1e-4)

    print("KERNEL_OK")
</pallas_src>

<mosaic_0001>
module attributes {stable_mosaic.version = 11 : i64} {
  func.func @_linear_sigmoid_kernel(%arg0: i32, %arg1: memref<5xf32, #tpu.memory_space<smem>>, %arg2: memref<4x8x384xf32, #tpu.memory_space<vmem>>, %arg3: memref<8x384xf32, #tpu.memory_space<vmem>>) attributes {dimension_semantics = [#tpu.dimension_semantics<parallel>], iteration_bounds = array<i64: 3>, scalar_prefetch = 1 : i64, scratch_operands = 0 : i64, tpu.core_type = #tpu.core_type<tc>, window_params = [{transform_indices = @transform_0, window_bounds = array<i64: 4, 8, 384>}, {transform_indices = @transform_1, window_bounds = array<i64: 8, 384>}]} {
    %c0 = arith.constant 0 : index
    %c0_0 = arith.constant 0 : index
    %c0_1 = arith.constant 0 : index
    %0 = vector.load %arg2[%c0, %c0_0, %c0_1] : memref<4x8x384xf32, #tpu.memory_space<vmem>>, vector<1x8x384xf32>
    %1 = vector.shape_cast %0 : vector<1x8x384xf32> to vector<8x384xf32>
    %c0_2 = arith.constant 0 : index
    %2 = memref.load %arg1[%c0_2] : memref<5xf32, #tpu.memory_space<smem>>
    %3 = vector.broadcast %2 : f32 to vector<8x384xf32>
    %4 = arith.mulf %1, %3 : vector<8x384xf32>
    %c1 = arith.constant 1 : index
    %c0_3 = arith.constant 0 : index
    %c0_4 = arith.constant 0 : index
    %5 = vector.load %arg2[%c1, %c0_3, %c0_4] : memref<4x8x384xf32, #tpu.memory_space<vmem>>, vector<1x8x384xf32>
    %6 = vector.shape_cast %5 : vector<1x8x384xf32> to vector<8x384xf32>
    %c1_5 = arith.constant 1 : index
    %7 = memref.load %arg1[%c1_5] : memref<5xf32, #tpu.memory_space<smem>>
    %8 = vector.broadcast %7 : f32 to vector<8x384xf32>
    %9 = arith.mulf %6, %8 : vector<8x384xf32>
    %10 = arith.addf %4, %9 : vector<8x384xf32>
    %c2 = arith.constant 2 : index
    %c0_6 = arith.constant 0 : index
    %c0_7 = arith.constant 0 : index
    %11 = vector.load %arg2[%c2, %c0_6, %c0_7] : memref<4x8x384xf32, #tpu.memory_space<vmem>>, vector<1x8x384xf32>
    %12 = vector.shape_cast %11 : vector<1x8x384xf32> to vector<8x384xf32>
    %c2_8 = arith.constant 2 : index
    %13 = memref.load %arg1[%c2_8] : memref<5xf32, #tpu.memory_space<smem>>
    %14 = vector.broadcast %13 : f32 to vector<8x384xf32>
    %15 = arith.mulf %12, %14 : vector<8x384xf32>
    %16 = arith.addf %10, %15 : vector<8x384xf32>
    %c3 = arith.constant 3 : index
    %c0_9 = arith.constant 0 : index
    %c0_10 = arith.constant 0 : index
    %17 = vector.load %arg2[%c3, %c0_9, %c0_10] : memref<4x8x384xf32, #tpu.memory_space<vmem>>, vector<1x8x384xf32>
    %18 = vector.shape_cast %17 : vector<1x8x384xf32> to vector<8x384xf32>
    %c3_11 = arith.constant 3 : index
    %19 = memref.load %arg1[%c3_11] : memref<5xf32, #tpu.memory_space<smem>>
    %20 = vector.broadcast %19 : f32 to vector<8x384xf32>
    %21 = arith.mulf %18, %20 : vector<8x384xf32>
    %22 = arith.addf %16, %21 : vector<8x384xf32>
    %c4 = arith.constant 4 : index
    %23 = memref.load %arg1[%c4] : memref<5xf32, #tpu.memory_space<smem>>
    %24 = vector.broadcast %23 : f32 to vector<8x384xf32>
    %25 = arith.addf %22, %24 : vector<8x384xf32>
    %cst = arith.constant 5.000000e-01 : f32
    %26 = vector.broadcast %cst : f32 to vector<8x384xf32>
    %27 = arith.mulf %26, %25 : vector<8x384xf32>
    %28 = math.tanh %27 : vector<8x384xf32>
    %cst_12 = arith.constant 5.000000e-01 : f32
    %29 = vector.broadcast %cst_12 : f32 to vector<8x384xf32>
    %30 = arith.mulf %29, %28 : vector<8x384xf32>
    %cst_13 = arith.constant 5.000000e-01 : f32
    %31 = vector.broadcast %cst_13 : f32 to vector<8x384xf32>
    %32 = arith.addf %30, %31 : vector<8x384xf32>
    %c0_14 = arith.constant 0 : index
    %c0_15 = arith.constant 0 : index
    %33 = vector.load %arg3[%c0_14, %c0_15] : memref<8x384xf32, #tpu.memory_space<vmem>>, vector<8x384xf32>
    tpu.vector_store %arg3[%c0_14, %c0_15], %32 {strides = array<i32>} : memref<8x384xf32, #tpu.memory_space<vmem>>, vector<8x384xf32>,
    return
  }
  func.func @transform_0(%arg0: i32, %arg1: memref<5xf32, #tpu.memory_space<smem>>) -> (i32, i32, i32) {
    %c0_i32 = arith.constant 0 : i32
    %c0_i32_0 = arith.constant 0 : i32
    %c0_i32_1 = arith.constant 0 : i32
    return %c0_i32, %c0_i32_0, %arg0 : i32, i32, i32
  }
  func.func @transform_1(%arg0: i32, %arg1: memref<5xf32, #tpu.memory_space<smem>>) -> (i32, i32) {
    %c0_i32 = arith.constant 0 : i32
    %c0_i32_0 = arith.constant 0 : i32
    return %c0_i32, %arg0 : i32, i32
  }
}

</mosaic_0001>

<llo_original>
// kernel: tpu_custom_call.1
$region0: #{tpu_custom_call.1}
  #allocation0 [shape = 'u32[]', space=smem, size = 0x4, offset = 0x4, fixed_abs, tag = 'smem constant byte address 0x4 - core index']
  #allocation1 [shape = 'u32[144,128]{1,0:T(1,128)}', space=vmem, size = 0x12000, scoped, tag = 'internal scratch']
  #allocation2 [shape = 's32[1]{0}', space=sflag, size = 0x4, scoped, tag = 'scoped memory for tpu_custom_call.1']
  #allocation3 [shape = 'u8[512]{0}', space=smem, size = 0x200, scoped, tag = 'prefetched SMEM operand 0']
  %s0 = inlined_call_operand.hbm [shape: f32[5], index: 0, kind: input, shape index: {}]
  %s1 = inlined_call_operand.hbm [shape: f32[4,8,1025], index: 1, kind: input, shape index: {}]
  %s2 = inlined_call_operand.hbm [shape: f32[8,1025], index: 2, kind: output, shape index: {}]
  %s3 = sld [smem:[#allocation0]]
  $region41: #{tpu_custom_call.1} parent=0
    _
  %s5 = ssub.s32 1, %s3
  %s6 = scalar_select 0, %s5, %s3
  %8 = dma.hbm_to_smem %s0, 16, [#allocation3], [#allocation2]
  %9 = dma.done [#allocation2], 16
  %10 = sfence
  $region1: #{tpu_custom_call.1} parent=0
    #allocation4 [shape = 'u8[98304]{0}', space=vmem, size = 0x18000, scoped, tag = 'input window, operand 1']
    #allocation5 [shape = 's32[2]{0}', space=sflag, size = 0x8, scoped, tag = 'scoped memory for tpu_custom_call.1']
    #allocation6 [shape = 's32[2]{0}', space=sflag, size = 0x8, scoped, tag = 'scoped memory for tpu_custom_call.1']
    #allocation7 [shape = 'u8[24576]{0}', space=vmem, size = 0x6000, scoped, tag = 'output window, operand 0']
    %11 = vsyncpa [#allocation5], 0
    %s12 = scalar_lea.sflag [#allocation5], 1
    %13 = vsyncpa %s12, 0
    %14 = vsyncpa [#allocation6], 0
    %s15 = scalar_lea.sflag [#allocation6], 1
    %16 = vsyncpa %s15, 0
    loop: start=0, step=1, limit=5
    $region2: #{tpu_custom_call.1} parent=1 // loop_pre_header
      _
    $region3: #{tpu_custom_call.1} parent=1 // loop_header
      %s18 = sphi 0, %s22
      %p19 = scmp.ge.s32.totalorder %s18, 5
      %s28 = sphi 0, %s30
      %s31 = sphi 0, %s28
      %s32 = sphi 0, %s31
      %s48 = sphi 0, %s32
      %s54 = sphi 0, %s56
      %s57 = sphi 0, %s54
      %s58 = sphi 0, %s57
      %s74 = sphi 0, %s58
    $region4: #{tpu_custom_call.1} parent=1 // loop_header_branch
      %21 = sbr.rel (%p19) target = $region8
    $region5: #{tpu_custom_call.1} parent=1 // loop_body
      %s23 = ssub.s32 %s18, 1
      %s24 = ssub.s32 %s18, 2
      %s25 = sadd.s32 %s18, 1
      %s26 = ssub.s32 %s18, %s25
      %p27 = scmp.eq.s32.totalorder %s26, 0
      %s29 = sadd.s32 %s28, 1
      %s30 = scalar_select %p27, %s28, %s29
      %p33 = pneg %p27
      %p34 = scmp.eq.s32.totalorder %s18, 2
      %p35 = por %p33, %p34
      %p36 = scmp.ne.s32.totalorder %s28, %s31
      %p37 = scmp.eq.s32.totalorder %s18, 0
      %p38 = por %p36, %p37
      %p39 = scmp.ne.s32.totalorder %s28, %s31
      %p40 = scmp.eq.s32.totalorder %s23, 2
      %p41 = por %p39, %p40
      %p42 = scmp.ne.s32.totalorder %s31, %s32
      %p43 = scmp.eq.s32.totalorder %s23, 0
      %p44 = por %p42, %p43
      %p45 = scmp.ne.s32.totalorder %s31, %s32
      %p46 = scmp.eq.s32.totalorder %s24, 2
      %p47 = por %p45, %p46
      %p49 = scmp.ne.s32.totalorder %s32, %s48
      %p50 = scmp.eq.s32.totalorder %s24, 0
      %p51 = por %p49, %p50
      %s52 = ssub.s32 %s18, %s25
      %p53 = scmp.eq.s32.totalorder %s52, 0
      %s55 = sadd.s32 %s54, 1
      %s56 = scalar_select %p53, %s54, %s55
      %p59 = pneg %p53
      %p60 = scmp.eq.s32.totalorder %s18, 2
      %p61 = por %p59, %p60
      %p62 = scmp.ne.s32.totalorder %s54, %s57
      %p63 = scmp.eq.s32.totalorder %s18, 0
      %p64 = por %p62, %p63
      %p65 = scmp.ne.s32.totalorder %s54, %s57
      %p66 = scmp.eq.s32.totalorder %s23, 2
      %p67 = por %p65, %p66
      %p68 = scmp.ne.s32.totalorder %s57, %s58
      %p69 = scmp.eq.s32.totalorder %s23, 0
      %p70 = por %p68, %p69
      %p71 = scmp.ne.s32.totalorder %s57, %s58
      %p72 = scmp.eq.s32.totalorder %s24, 2
      %p73 = por %p71, %p72
      %p75 = scmp.ne.s32.totalorder %s58, %s74
      %p76 = scmp.eq.s32.totalorder %s24, 0
      %p77 = por %p75, %p76
      %p78 = scmp.le.s32.totalorder 1, %s18
      %p79 = scmp.lt.s32.totalorder %s18, 4
      %p80 = pnand %p78, %p79
      %p81 = pneg %p80
      // Predicated region
      $region9: #{tpu_custom_call.1} parent=5 // pred_check
        _
      $region10: #{tpu_custom_call.1} parent=5 // pred_check_branch
        %83 = sbr.rel (%p80) target = $region12
      $region11: #{tpu_custom_call.1} parent=5 // pred_region
        %s84 = ssub.s32 %s18, 1
      $region12: #{tpu_custom_call.1} parent=5 // pred_fallthru
        _
      %p85 = scmp.lt.s32.totalorder %s18, 3
      // Predicated region
      $region13: #{tpu_custom_call.1} parent=5 // pred_check
        %p86 = pneg %p85
      $region14: #{tpu_custom_call.1} parent=5 // pred_check_branch
        %88 = sbr.rel (%p86) target = $region16
      $region15: #{tpu_custom_call.1} parent=5 // pred_region
        // Predicated region
        $region17: #{tpu_custom_call.1} parent=15 // pred_check
          %p89 = pneg %p38
        $region18: #{tpu_custom_call.1} parent=15 // pred_check_branch
          %91 = sbr.rel (%p89) target = $region20
        $region19: #{tpu_custom_call.1} parent=15 // pred_region
          %s92 = sand.u32 %s28, 1
          %s93 = scalar_lea.sflag [#allocation5], %s92
          %s94 = sand.u32 %s28, 1
          %s95 = smul.addr %s94, 96
          %s96 = scalar_lea.vmem [#allocation4], %s95
          %s97 = smul.u32 3, %s18
          %s99 = ssub.s32 1536, 1536
          %100 = vsyncadd %s93, %s99
          %s101 = smul.addr %s97, 128
          %s102 = scalar_lea.hbm %s1, %s101
          %s103 = sshll.u32 %s96, 4
          %s104 = int_to_ptr.vmem [resolvable:$true] %s103
          %109 = dma.hbm_to_vmem [thread:$0]  %s102, 1536, %s104, %s93, 1152, 384, 24
        $region20: #{tpu_custom_call.1} parent=15 // pred_fallthru
          _
      $region16: #{tpu_custom_call.1} parent=5 // pred_fallthru
        _
      %p110 = scmp.le.s32.totalorder 1, %s18
      %p111 = scmp.lt.s32.totalorder %s18, 4
      %p112 = pnand %p110, %p111
      %p113 = pneg %p112
      // Predicated region
      $region21: #{tpu_custom_call.1} parent=5 // pred_check
        _
      $region22: #{tpu_custom_call.1} parent=5 // pred_check_branch
        %115 = sbr.rel (%p112) target = $region24
      $region23: #{tpu_custom_call.1} parent=5 // pred_region
        %s116 = ssub.s32 %s18, 1
        %s117 = sand.u32 %s31, 1
        %s118 = scalar_lea.sflag [#allocation5], %s117
        %s119 = sand.u32 %s31, 1
        %s120 = smul.addr %s119, 96
        %s121 = scalar_lea.vmem [#allocation4], %s120
        // Predicated region
        $region25: #{tpu_custom_call.1} parent=23 // pred_check
          %p122 = pneg %p44
        $region26: #{tpu_custom_call.1} parent=23 // pred_check_branch
          %124 = sbr.rel (%p122) target = $region28
        $region27: #{tpu_custom_call.1} parent=23 // pred_region
          %125 = dma.done %s118, 1536
        $region28: #{tpu_custom_call.1} parent=23 // pred_fallthru
          _
        %s126 = sand.u32 %s31, 1
        %s127 = scalar_lea.sflag [#allocation5], %s126
        %s128 = sand.u32 %s31, 1
        %s129 = smul.addr %s128, 96
        %s130 = scalar_lea.vmem [#allocation4], %s129
        %p131 = pneg %p44
        %p132 = pneg %p41
        %p133 = pneg %p70
        %p134 = pneg %p67
        %s135 = sand.u32 %s57, 1
        %s136 = scalar_lea.sflag [#allocation6], %s135
        %s137 = sand.u32 %s57, 1
        %s138 = smul.addr %s137, 24
        %s139 = scalar_lea.vmem [#allocation7], %s138
        %s140 = smul.u32 3, %s23
        %s141 = smul.u32 3, %s23
        %v142 = vld [vmem:[%s121] sm:$0xff]
        %v143 = vld [vmem:[%s121 + $0x8] sm:$0xff]
        %v144 = vld [vmem:[%s121 + $0x10] sm:$0xff]
        %s145 = sld [smem:[#allocation3]]
        %v146 = vstv %s145
        %v147 = vmul.f32 %v142, %v146
        %v148 = vmul.f32 %v143, %v146
        %v149 = vmul.f32 %v144, %v146
        %s150 = scalar_lea.vmem %s121, 24 [#allocation4]
        %v151 = vld [vmem:[%s150] sm:$0xff]
        %v152 = vld [vmem:[%s150 + $0x8] sm:$0xff]
        %v153 = vld [vmem:[%s150 + $0x10] sm:$0xff]
        %s154 = sld [smem:[#allocation3 + $0x1]]
        %v155 = vstv %s154
        %v156 = vmul.f32 %v151, %v155
        %v157 = vmul.f32 %v152, %v155
        %v158 = vmul.f32 %v153, %v155
        %v159 = vadd.f32 %v147, %v156
        %v160 = vadd.f32 %v148, %v157
        %v161 = vadd.f32 %v149, %v158
        %s162 = scalar_lea.vmem %s121, 48 [#allocation4]
        %v163 = vld [vmem:[%s162] sm:$0xff]
        %v164 = vld [vmem:[%s162 + $0x8] sm:$0xff]
        %v165 = vld [vmem:[%s162 + $0x10] sm:$0xff]
        %s166 = sld [smem:[#allocation3 + $0x2]]
        %v167 = vstv %s166
        %v168 = vmul.f32 %v163, %v167
        %v169 = vmul.f32 %v164, %v167
        %v170 = vmul.f32 %v165, %v167
        %v171 = vadd.f32 %v159, %v168
        %v172 = vadd.f32 %v160, %v169
        %v173 = vadd.f32 %v161, %v170
        %s174 = scalar_lea.vmem %s121, 72 [#allocation4]
        %v175 = vld [vmem:[%s174] sm:$0xff]
        %v176 = vld [vmem:[%s174 + $0x8] sm:$0xff]
        %v177 = vld [vmem:[%s174 + $0x10] sm:$0xff]
        %s178 = sld [smem:[#allocation3 + $0x3]]
        %v179 = vstv %s178
        %v180 = vmul.f32 %v175, %v179
        %v181 = vmul.f32 %v176, %v179
        %v182 = vmul.f32 %v177, %v179
        %v183 = vadd.f32 %v171, %v180
        %v184 = vadd.f32 %v172, %v181
        %v185 = vadd.f32 %v173, %v182
        %s186 = sld [smem:[#allocation3 + $0x4]]
        %v187 = vstv %s186
        %v188 = vadd.f32 %v183, %v187
        %v189 = vadd.f32 %v184, %v187
        %v190 = vadd.f32 %v185, %v187
        %v191 = vmul.f32 %v188, 0.5
        %v192 = vmul.f32 %v189, 0.5
        %v193 = vmul.f32 %v190, 0.5
        %v194 = vtanh.pop %v191
        %v195 = vtanh.pop %v192
        %v196 = vtanh.pop %v193
        %v197 = vmul.f32 %v194, 0.5
        %v198 = vmul.f32 %v195, 0.5
        %v199 = vmul.f32 %v196, 0.5
        %v200 = vadd.f32 %v197, 0.5
        %v201 = vadd.f32 %v198, 0.5
        %v202 = vadd.f32 %v199, 0.5
        %203 = vst [vmem:[%s139] sm:$0xff] %v200
        %204 = vst [vmem:[%s139 + $0x8] sm:$0xff] %v201
        %205 = vst [vmem:[%s139 + $0x10] sm:$0xff] %v202
        %s206 = sand.u32 %s57, 1
        %s207 = scalar_lea.sflag [#allocation6], %s206
        %s208 = sand.u32 %s57, 1
        %s209 = smul.addr %s208, 24
        %s210 = scalar_lea.vmem [#allocation7], %s209
        // Predicated region
        $region29: #{tpu_custom_call.1} parent=23 // pred_check
          %p211 = pneg %p67
        $region30: #{tpu_custom_call.1} parent=23 // pred_check_branch
          %213 = sbr.rel (%p211) target = $region32
        $region31: #{tpu_custom_call.1} parent=23 // pred_region
          %s214 = smul.u32 3, %s23
          %s216 = ssub.s32 384, 384
          %217 = vsyncadd %s207, %s216
          %s218 = smul.addr %s214, 128
          %s219 = scalar_lea.hbm %s2, %s218
          %s221 = sshll.u32 %s210, 4
          %s222 = int_to_ptr.vmem [resolvable:$true] %s221
          %224 = dma.vmem_to_hbm [thread:$0]  %s222, 384, %s219, %s207
        $region32: #{tpu_custom_call.1} parent=23 // pred_fallthru
          _
      $region24: #{tpu_custom_call.1} parent=5 // pred_fallthru
        _
      %p225 = scmp.le.s32.totalorder 2, %s18
      // Predicated region
      $region33: #{tpu_custom_call.1} parent=5 // pred_check
        %p226 = pneg %p225
      $region34: #{tpu_custom_call.1} parent=5 // pred_check_branch
        %228 = sbr.rel (%p226) target = $region36
      $region35: #{tpu_custom_call.1} parent=5 // pred_region
        %s229 = ssub.s32 %s18, 2
        // Predicated region
        $region37: #{tpu_custom_call.1} parent=35 // pred_check
          %p230 = pneg %p73
        $region38: #{tpu_custom_call.1} parent=35 // pred_check_branch
          %232 = sbr.rel (%p230) target = $region40
        $region39: #{tpu_custom_call.1} parent=35 // pred_region
          %s233 = sand.u32 %s58, 1
          %s234 = scalar_lea.sflag [#allocation6], %s233
          %s235 = sand.u32 %s58, 1
          %s236 = smul.addr %s235, 24
          %s237 = scalar_lea.vmem [#allocation7], %s236
          %238 = dma.done %s234, 384
        $region40: #{tpu_custom_call.1} parent=35 // pred_fallthru
          _
      $region36: #{tpu_custom_call.1} parent=5 // pred_fallthru
        _
    $region6: #{tpu_custom_call.1} parent=1 // loop_footer
      %s22 = sadd.s32 1, %s18
    $region7: #{tpu_custom_call.1} parent=1 // loop_footer_branch
      %17 = sbr.rel target = $region3
    $region8: #{tpu_custom_call.1} parent=1 // loop_exit
      _
    %239 = vsyncpa [#allocation5], 1
    %s240 = scalar_lea.sflag [#allocation5], 1
    %241 = vsyncpa %s240, 1
    %242 = vsyncpa [#allocation6], 1
    %s243 = scalar_lea.sflag [#allocation6], 1
    %244 = vsyncpa %s243, 1

</llo_original>
